<compile_context>
chip_gen: v5e
topology: v5e:2x2
jax: 0.10.0
libtpu: 0.0.40
codegen_flags: <defaults>
</compile_context>

<pallas_src>
import functools

import jax
import jax.numpy as jnp
from jax.experimental import pallas as pl
from jax.experimental.pallas import tpu as pltpu

# MXU operand dtype. Keep f32 here so the self-test matches the f32 reference
# tightly; set to jnp.bfloat16 on v6e/v7x for full MXU rate (accumulation and
# all gate/cell elementwise math stay f32 regardless).
MXU_IN_DTYPE = jnp.float32


def _seqgen_kernel(tok_ref, emb_ref, wih_ref, whh_ref, b_ref, wfc_ref, bfc_ref,
                   out_ref, *, seq_len, batch):
    """Fused embedding-gather + LSTM + FC in one invocation.

    tok_ref : (B, S)    int32 token ids (SMEM)
    emb_ref : (V, E)    embedding table
    wih_ref : (E, 4H)   input->gates weights (transposed, gate order i,f,g,o)
    whh_ref : (H, 4H)   hidden->gates weights (transposed)
    b_ref   : (1, 4H)   combined bias (b_ih + b_hh)
    wfc_ref : (H, Vp)   fc weight (transposed, lane-padded to Vp)
    bfc_ref : (1, Vp)   fc bias (lane-padded)
    out_ref : (B*S, Vp) logits, batch-major flattened, lane-dense
    """
    H = whh_ref.shape[0]

    # ---- in-kernel embedding gather (time-major rows); independent of the
    #      recurrence, so it overlaps with nothing on the serial path ----
    rows = []
    for t in range(seq_len):
        for bidx in range(batch):
            tok = tok_ref[bidx, t]                       # scalar from SMEM
            rows.append(emb_ref[pl.ds(tok, 1), :])       # (1, E) dynamic row
    x = jnp.concatenate(rows, axis=0)                    # (S*B, E), time-major

    # ---- prologue: hoisted input->gates projection for ALL time steps ----
    xw = jnp.dot(x.astype(MXU_IN_DTYPE), wih_ref[...].astype(MXU_IN_DTYPE),
                 preferred_element_type=jnp.float32) + b_ref[...]   # (S*B, 4H)
    # slice per-step chunks up front -> the sublane selects are off the
    # h-dependent critical path
    xw_chunks = [xw[t * batch:(t + 1) * batch, :] for t in range(seq_len)]

    whh = whh_ref[...].astype(MXU_IN_DTYPE)              # (H, 4H)

    # per-lane scale for fused sigmoid-via-tanh:
    #   sigmoid(z) = 0.5 * (1 + tanh(z/2))  -> scale 0.5 on i/f/o lanes,
    #   plain tanh(z) on g lanes            -> scale 1.0
    lane = jax.lax.broadcasted_iota(jnp.int32, (1, 4 * H), 1)
    scale = jnp.where((lane >= 2 * H) & (lane < 3 * H), 1.0, 0.5)
    scale = jnp.broadcast_to(scale.astype(jnp.float32), (batch, 4 * H))  # hoisted

    h = jnp.zeros((batch, H), jnp.float32)
    c = jnp.zeros((batch, H), jnp.float32)
    hs = []

    # ---- fully-unrolled time recurrence: one matmul + two EUP calls per step --
    for t in range(seq_len):
        gates = xw_chunks[t] + jnp.dot(h.astype(MXU_IN_DTYPE), whh,
                                       preferred_element_type=jnp.float32)  # (B,4H)
        tg = jnp.tanh(gates * scale)      # single EUP call covering all 4 gates
        sg = 0.5 + 0.5 * tg               # == sigmoid(gates) on i/f/o lanes
        i_g = sg[:, 0 * H:1 * H]
        f_g = sg[:, 1 * H:2 * H]
        g_g = tg[:, 2 * H:3 * H]
        o_g = sg[:, 3 * H:4 * H]
        c = f_g * c + i_g * g_g
        h = o_g * jnp.tanh(c)             # second (and last) EUP call per step
        hs.append(h)                      # kept in vregs, no VMEM scratch store

    # ---- epilogue: reorder the tiny hidden slab to batch-major in vregs,
    #      then ONE lane-dense FC matmul writing the final layout ----
    h_bm = jnp.concatenate(
        [jnp.concatenate([hs[t][bidx:bidx + 1, :] for t in range(seq_len)], axis=0)
         for bidx in range(batch)], axis=0)              # (B*S, H), batch-major
    logits = jnp.dot(h_bm.astype(MXU_IN_DTYPE), wfc_ref[...].astype(MXU_IN_DTYPE),
                     preferred_element_type=jnp.float32) + bfc_ref[...]
    out_ref[...] = logits.astype(out_ref.dtype)


def seq_generation_forward(tokens, params):
    """tokens: int32 [B, S]. Returns logits [B, S, V] (is_test=False path)."""
    emb = params["embedding"]          # (V, E)
    wih = params["w_ih"]               # (E, 4H)
    whh = params["w_hh"]               # (H, 4H)
    b = params["b"]                    # (1, 4H)
    wfc = params["w_fc"]               # (H, V)
    bfc = params["b_fc"]               # (1, V)

    B, S = tokens.shape
    V, E = emb.shape
    H = whh.shape[0]

    # Lane-dense output: pad V up to a multiple of 128 (weight-side pad is a
    # one-time prep in real deployments), slice back after the kernel.
    V_pad = ((V + 127) // 128) * 128
    if V_pad != V:
        wfc = jnp.pad(wfc, ((0, 0), (0, V_pad - V)))
        bfc = jnp.pad(bfc, ((0, 0), (0, V_pad - V)))

    kernel = functools.partial(_seqgen_kernel, seq_len=S, batch=B)

    smem_spec = pl.BlockSpec(memory_space=pltpu.MemorySpace.SMEM)
    vmem_spec = pl.BlockSpec(memory_space=pltpu.MemorySpace.VMEM)

    out2 = pl.pallas_call(
        kernel,
        out_shape=jax.ShapeDtypeStruct((B * S, V_pad), jnp.float32),
        in_specs=[smem_spec] + [vmem_spec] * 6,
        out_specs=vmem_spec,
    )(tokens.astype(jnp.int32), emb, wih, whh, b, wfc, bfc)

    out = out2.reshape(B, S, V_pad)            # batch-major already; no transpose
    return out[:, :, :V] if V_pad != V else out


def _reference_forward(tokens, params):
    """Pure-JAX reference (lax.scan LSTM) for validation."""
    emb, wih, whh, b = params["embedding"], params["w_ih"], params["w_hh"], params["b"]
    wfc, bfc = params["w_fc"], params["b_fc"]
    H = whh.shape[0]
    x = jnp.take(emb, tokens, axis=0)              # (B, S, E)
    x_tm = jnp.transpose(x, (1, 0, 2))             # (S, B, E)
    B = tokens.shape[0]

    def step(carry, xt):
        h, c = carry
        gates = xt @ wih + h @ whh + b
        i = jax.nn.sigmoid(gates[:, 0 * H:1 * H])
        f = jax.nn.sigmoid(gates[:, 1 * H:2 * H])
        g = jnp.tanh(gates[:, 2 * H:3 * H])
        o = jax.nn.sigmoid(gates[:, 3 * H:4 * H])
        c = f * c + i * g
        h = o * jnp.tanh(c)
        return (h, c), h

    h0 = jnp.zeros((B, H), jnp.float32)
    c0 = jnp.zeros((B, H), jnp.float32)
    _, hs = jax.lax.scan(step, (h0, c0), x_tm)     # (S, B, H)
    logits = hs @ wfc + bfc                        # (S, B, V)
    return jnp.transpose(logits, (1, 0, 2))


def init_params(key, vocab_size, embedding_size, hidden_size):
    k = jax.random.split(key, 6)
    # xavier-normal-ish embedding, standard uniform-ish LSTM / fc init
    emb = jax.random.normal(k[0], (vocab_size, embedding_size), jnp.float32) \
        * jnp.sqrt(2.0 / (vocab_size + embedding_size))
    s = 1.0 / jnp.sqrt(hidden_size)
    w_ih = jax.random.uniform(k[1], (embedding_size, 4 * hidden_size),
                              jnp.float32, -s, s)
    w_hh = jax.random.uniform(k[2], (hidden_size, 4 * hidden_size),
                              jnp.float32, -s, s)
    b_ih = jax.random.uniform(k[3], (4 * hidden_size,), jnp.float32, -s, s)
    b_hh = jax.random.uniform(k[4], (4 * hidden_size,), jnp.float32, -s, s)
    w_fc = jax.random.uniform(k[5], (hidden_size, vocab_size),
                              jnp.float32, -s, s)
    b_fc = jnp.zeros((vocab_size,), jnp.float32)
    # NOTE: weights are pre-transposed relative to PyTorch's (4H,E)/(4H,H)/(V,H);
    # importing real torch weights requires explicit .T and bias summation.
    return {
        "embedding": emb,
        "w_ih": w_ih,
        "w_hh": w_hh,
        "b": (b_ih + b_hh)[None, :],
        "w_fc": w_fc,
        "b_fc": b_fc[None, :],
    }


if __name__ == "__main__":
    # small shapes consistent with the module's forward
    VOCAB, EMBED, HIDDEN = 32, 16, 32
    BATCH, SEQ = 2, 8

    key = jax.random.PRNGKey(0)
    kp, kt = jax.random.split(key)
    params = init_params(kp, VOCAB, EMBED, HIDDEN)
    tokens = jax.random.randint(kt, (BATCH, SEQ), 0, VOCAB, dtype=jnp.int32)

    out = seq_generation_forward(tokens, params)
    out = jax.block_until_ready(out)

    ref = _reference_forward(tokens, params)
    assert out.shape == (BATCH, SEQ, VOCAB)
    assert jnp.allclose(out, ref, atol=1e-4, rtol=1e-4), "mismatch vs reference"

    print("KERNEL_OK")
</pallas_src>

<mosaic_0001>
module attributes {stable_mosaic.version = 11 : i64} {
  func.func @_seqgen_kernel(%arg0: memref<2x8xi32, #tpu.memory_space<smem>>, %arg1: memref<32x16xf32, #tpu.memory_space<vmem>>, %arg2: memref<16x128xf32, #tpu.memory_space<vmem>>, %arg3: memref<32x128xf32, #tpu.memory_space<vmem>>, %arg4: memref<1x128xf32, #tpu.memory_space<vmem>>, %arg5: memref<32x128xf32, #tpu.memory_space<vmem>>, %arg6: memref<1x128xf32, #tpu.memory_space<vmem>>, %arg7: memref<16x128xf32, #tpu.memory_space<vmem>>) attributes {dimension_semantics = [], scalar_prefetch = 0 : i64, scratch_operands = 0 : i64, tpu.core_type = #tpu.core_type<tc>} {
    %c0 = arith.constant 0 : index
    %c0_0 = arith.constant 0 : index
    %0 = memref.load %arg0[%c0, %c0_0] : memref<2x8xi32, #tpu.memory_space<smem>>
    %1 = arith.index_cast %0 : i32 to index
    %c0_1 = arith.constant 0 : index
    %2 = vector.load %arg1[%1, %c0_1] : memref<32x16xf32, #tpu.memory_space<vmem>>, vector<1x16xf32>
    %c1 = arith.constant 1 : index
    %c0_2 = arith.constant 0 : index
    %3 = memref.load %arg0[%c1, %c0_2] : memref<2x8xi32, #tpu.memory_space<smem>>
    %4 = arith.index_cast %3 : i32 to index
    %c0_3 = arith.constant 0 : index
    %5 = vector.load %arg1[%4, %c0_3] : memref<32x16xf32, #tpu.memory_space<vmem>>, vector<1x16xf32>
    %c0_4 = arith.constant 0 : index
    %c1_5 = arith.constant 1 : index
    %6 = memref.load %arg0[%c0_4, %c1_5] : memref<2x8xi32, #tpu.memory_space<smem>>
    %7 = arith.index_cast %6 : i32 to index
    %c0_6 = arith.constant 0 : index
    %8 = vector.load %arg1[%7, %c0_6] : memref<32x16xf32, #tpu.memory_space<vmem>>, vector<1x16xf32>
    %c1_7 = arith.constant 1 : index
    %c1_8 = arith.constant 1 : index
    %9 = memref.load %arg0[%c1_7, %c1_8] : memref<2x8xi32, #tpu.memory_space<smem>>
    %10 = arith.index_cast %9 : i32 to index
    %c0_9 = arith.constant 0 : index
    %11 = vector.load %arg1[%10, %c0_9] : memref<32x16xf32, #tpu.memory_space<vmem>>, vector<1x16xf32>
    %c0_10 = arith.constant 0 : index
    %c2 = arith.constant 2 : index
    %12 = memref.load %arg0[%c0_10, %c2] : memref<2x8xi32, #tpu.memory_space<smem>>
    %13 = arith.index_cast %12 : i32 to index
    %c0_11 = arith.constant 0 : index
    %14 = vector.load %arg1[%13, %c0_11] : memref<32x16xf32, #tpu.memory_space<vmem>>, vector<1x16xf32>
    %c1_12 = arith.constant 1 : index
    %c2_13 = arith.constant 2 : index
    %15 = memref.load %arg0[%c1_12, %c2_13] : memref<2x8xi32, #tpu.memory_space<smem>>
    %16 = arith.index_cast %15 : i32 to index
    %c0_14 = arith.constant 0 : index
    %17 = vector.load %arg1[%16, %c0_14] : memref<32x16xf32, #tpu.memory_space<vmem>>, vector<1x16xf32>
    %c0_15 = arith.constant 0 : index
    %c3 = arith.constant 3 : index
    %18 = memref.load %arg0[%c0_15, %c3] : memref<2x8xi32, #tpu.memory_space<smem>>
    %19 = arith.index_cast %18 : i32 to index
    %c0_16 = arith.constant 0 : index
    %20 = vector.load %arg1[%19, %c0_16] : memref<32x16xf32, #tpu.memory_space<vmem>>, vector<1x16xf32>
    %c1_17 = arith.constant 1 : index
    %c3_18 = arith.constant 3 : index
    %21 = memref.load %arg0[%c1_17, %c3_18] : memref<2x8xi32, #tpu.memory_space<smem>>
    %22 = arith.index_cast %21 : i32 to index
    %c0_19 = arith.constant 0 : index
    %23 = vector.load %arg1[%22, %c0_19] : memref<32x16xf32, #tpu.memory_space<vmem>>, vector<1x16xf32>
    %c0_20 = arith.constant 0 : index
    %c4 = arith.constant 4 : index
    %24 = memref.load %arg0[%c0_20, %c4] : memref<2x8xi32, #tpu.memory_space<smem>>
    %25 = arith.index_cast %24 : i32 to index
    %c0_21 = arith.constant 0 : index
    %26 = vector.load %arg1[%25, %c0_21] : memref<32x16xf32, #tpu.memory_space<vmem>>, vector<1x16xf32>
    %c1_22 = arith.constant 1 : index
    %c4_23 = arith.constant 4 : index
    %27 = memref.load %arg0[%c1_22, %c4_23] : memref<2x8xi32, #tpu.memory_space<smem>>
    %28 = arith.index_cast %27 : i32 to index
    %c0_24 = arith.constant 0 : index
    %29 = vector.load %arg1[%28, %c0_24] : memref<32x16xf32, #tpu.memory_space<vmem>>, vector<1x16xf32>
    %c0_25 = arith.constant 0 : index
    %c5 = arith.constant 5 : index
    %30 = memref.load %arg0[%c0_25, %c5] : memref<2x8xi32, #tpu.memory_space<smem>>
    %31 = arith.index_cast %30 : i32 to index
    %c0_26 = arith.constant 0 : index
    %32 = vector.load %arg1[%31, %c0_26] : memref<32x16xf32, #tpu.memory_space<vmem>>, vector<1x16xf32>
    %c1_27 = arith.constant 1 : index
    %c5_28 = arith.constant 5 : index
    %33 = memref.load %arg0[%c1_27, %c5_28] : memref<2x8xi32, #tpu.memory_space<smem>>
    %34 = arith.index_cast %33 : i32 to index
    %c0_29 = arith.constant 0 : index
    %35 = vector.load %arg1[%34, %c0_29] : memref<32x16xf32, #tpu.memory_space<vmem>>, vector<1x16xf32>
    %c0_30 = arith.constant 0 : index
    %c6 = arith.constant 6 : index
    %36 = memref.load %arg0[%c0_30, %c6] : memref<2x8xi32, #tpu.memory_space<smem>>
    %37 = arith.index_cast %36 : i32 to index
    %c0_31 = arith.constant 0 : index
    %38 = vector.load %arg1[%37, %c0_31] : memref<32x16xf32, #tpu.memory_space<vmem>>, vector<1x16xf32>
    %c1_32 = arith.constant 1 : index
    %c6_33 = arith.constant 6 : index
    %39 = memref.load %arg0[%c1_32, %c6_33] : memref<2x8xi32, #tpu.memory_space<smem>>
    %40 = arith.index_cast %39 : i32 to index
    %c0_34 = arith.constant 0 : index
    %41 = vector.load %arg1[%40, %c0_34] : memref<32x16xf32, #tpu.memory_space<vmem>>, vector<1x16xf32>
    %c0_35 = arith.constant 0 : index
    %c7 = arith.constant 7 : index
    %42 = memref.load %arg0[%c0_35, %c7] : memref<2x8xi32, #tpu.memory_space<smem>>
    %43 = arith.index_cast %42 : i32 to index
    %c0_36 = arith.constant 0 : index
    %44 = vector.load %arg1[%43, %c0_36] : memref<32x16xf32, #tpu.memory_space<vmem>>, vector<1x16xf32>
    %c1_37 = arith.constant 1 : index
    %c7_38 = arith.constant 7 : index
    %45 = memref.load %arg0[%c1_37, %c7_38] : memref<2x8xi32, #tpu.memory_space<smem>>
    %46 = arith.index_cast %45 : i32 to index
    %c0_39 = arith.constant 0 : index
    %47 = vector.load %arg1[%46, %c0_39] : memref<32x16xf32, #tpu.memory_space<vmem>>, vector<1x16xf32>
    %48 = tpu.concatenate %2, %5, %8, %11, %14, %17, %20, %23, %26, %29, %32, %35, %38, %41, %44, %47 in 0 : vector<1x16xf32>, vector<1x16xf32>, vector<1x16xf32>, vector<1x16xf32>, vector<1x16xf32>, vector<1x16xf32>, vector<1x16xf32>, vector<1x16xf32>, vector<1x16xf32>, vector<1x16xf32>, vector<1x16xf32>, vector<1x16xf32>, vector<1x16xf32>, vector<1x16xf32>, vector<1x16xf32>, vector<1x16xf32> -> vector<16x16xf32>
    %c0_40 = arith.constant 0 : index
    %c0_41 = arith.constant 0 : index
    %49 = vector.load %arg2[%c0_40, %c0_41] : memref<16x128xf32, #tpu.memory_space<vmem>>, vector<16x128xf32>
    %cst = arith.constant dense<0.000000e+00> : vector<16x128xf32>
    %50 = tpu.matmul %48, %49, %cst {dimension_numbers = #tpu.dot_dimension_numbers<[1], [0], [0], [1], [0, 0, 1, 1], [], []>} : vector<16x16xf32>, vector<16x128xf32>, vector<16x128xf32> -> vector<16x128xf32>
    %c0_42 = arith.constant 0 : index
    %c0_43 = arith.constant 0 : index
    %51 = vector.load %arg4[%c0_42, %c0_43] : memref<1x128xf32, #tpu.memory_space<vmem>>, vector<1x128xf32>
    %52 = vector.broadcast %51 : vector<1x128xf32> to vector<16x128xf32>
    %53 = arith.addf %50, %52 : vector<16x128xf32>
    %54 = vector.extract_strided_slice %53 {offsets = [0, 0], sizes = [2, 128], strides = [1, 1]} : vector<16x128xf32> to vector<2x128xf32>
    %55 = vector.extract_strided_slice %53 {offsets = [2, 0], sizes = [2, 128], strides = [1, 1]} : vector<16x128xf32> to vector<2x128xf32>
    %56 = vector.extract_strided_slice %53 {offsets = [4, 0], sizes = [2, 128], strides = [1, 1]} : vector<16x128xf32> to vector<2x128xf32>
    %57 = vector.extract_strided_slice %53 {offsets = [6, 0], sizes = [2, 128], strides = [1, 1]} : vector<16x128xf32> to vector<2x128xf32>
    %58 = vector.extract_strided_slice %53 {offsets = [8, 0], sizes = [2, 128], strides = [1, 1]} : vector<16x128xf32> to vector<2x128xf32>
    %59 = vector.extract_strided_slice %53 {offsets = [10, 0], sizes = [2, 128], strides = [1, 1]} : vector<16x128xf32> to vector<2x128xf32>
    %60 = vector.extract_strided_slice %53 {offsets = [12, 0], sizes = [2, 128], strides = [1, 1]} : vector<16x128xf32> to vector<2x128xf32>
    %61 = vector.extract_strided_slice %53 {offsets = [14, 0], sizes = [2, 128], strides = [1, 1]} : vector<16x128xf32> to vector<2x128xf32>
    %c0_44 = arith.constant 0 : index
    %c0_45 = arith.constant 0 : index
    %62 = vector.load %arg3[%c0_44, %c0_45] : memref<32x128xf32, #tpu.memory_space<vmem>>, vector<32x128xf32>
    %63 = tpu.iota {dimensions = array<i32: 1>} : vector<1x128xi32>
    %c64_i32 = arith.constant 64 : i32
    %64 = vector.broadcast %c64_i32 : i32 to vector<1x128xi32>
    %65 = arith.cmpi sge, %63, %64 : vector<1x128xi32>
    %c96_i32 = arith.constant 96 : i32
    %66 = vector.broadcast %c96_i32 : i32 to vector<1x128xi32>
    %67 = arith.cmpi slt, %63, %66 : vector<1x128xi32>
    %68 = arith.andi %65, %67 : vector<1x128xi1>
    %cst_46 = arith.constant 1.000000e+00 : f32
    %cst_47 = arith.constant 5.000000e-01 : f32
    %69 = vector.broadcast %cst_46 : f32 to vector<1x128xf32>
    %70 = vector.broadcast %cst_47 : f32 to vector<1x128xf32>
    %71 = arith.select %68, %69, %70 : vector<1x128xi1>, vector<1x128xf32>
    %72 = vector.shape_cast %71 : vector<1x128xf32> to vector<1x128xf32>
    %73 = vector.broadcast %72 : vector<1x128xf32> to vector<2x128xf32>
    %cst_48 = arith.constant 0.000000e+00 : f32
    %74 = vector.broadcast %cst_48 : f32 to vector<2x32xf32>
    %cst_49 = arith.constant 0.000000e+00 : f32
    %75 = vector.broadcast %cst_49 : f32 to vector<2x32xf32>
    %cst_50 = arith.constant dense<0.000000e+00> : vector<2x128xf32>
    %76 = tpu.matmul %74, %62, %cst_50 {dimension_numbers = #tpu.dot_dimension_numbers<[1], [0], [0], [1], [0, 0, 1, 1], [], []>} : vector<2x32xf32>, vector<32x128xf32>, vector<2x128xf32> -> vector<2x128xf32>
    %77 = arith.addf %54, %76 : vector<2x128xf32>
    %78 = arith.mulf %77, %73 : vector<2x128xf32>
    %79 = math.tanh %78 : vector<2x128xf32>
    %cst_51 = arith.constant 5.000000e-01 : f32
    %80 = vector.broadcast %cst_51 : f32 to vector<2x128xf32>
    %81 = arith.mulf %80, %79 : vector<2x128xf32>
    %cst_52 = arith.constant 5.000000e-01 : f32
    %82 = vector.broadcast %cst_52 : f32 to vector<2x128xf32>
    %83 = arith.addf %82, %81 : vector<2x128xf32>
    %84 = vector.extract_strided_slice %83 {offsets = [0, 0], sizes = [2, 32], strides = [1, 1]} : vector<2x128xf32> to vector<2x32xf32>
    %85 = vector.extract_strided_slice %83 {offsets = [0, 32], sizes = [2, 32], strides = [1, 1]} : vector<2x128xf32> to vector<2x32xf32>
    %86 = vector.extract_strided_slice %79 {offsets = [0, 64], sizes = [2, 32], strides = [1, 1]} : vector<2x128xf32> to vector<2x32xf32>
    %87 = vector.extract_strided_slice %83 {offsets = [0, 96], sizes = [2, 32], strides = [1, 1]} : vector<2x128xf32> to vector<2x32xf32>
    %88 = arith.mulf %85, %75 : vector<2x32xf32>
    %89 = arith.mulf %84, %86 : vector<2x32xf32>
    %90 = arith.addf %88, %89 : vector<2x32xf32>
    %91 = math.tanh %90 : vector<2x32xf32>
    %92 = arith.mulf %87, %91 : vector<2x32xf32>
    %cst_53 = arith.constant dense<0.000000e+00> : vector<2x128xf32>
    %93 = tpu.matmul %92, %62, %cst_53 {dimension_numbers = #tpu.dot_dimension_numbers<[1], [0], [0], [1], [0, 0, 1, 1], [], []>} : vector<2x32xf32>, vector<32x128xf32>, vector<2x128xf32> -> vector<2x128xf32>
    %94 = arith.addf %55, %93 : vector<2x128xf32>
    %95 = arith.mulf %94, %73 : vector<2x128xf32>
    %96 = math.tanh %95 : vector<2x128xf32>
    %cst_54 = arith.constant 5.000000e-01 : f32
    %97 = vector.broadcast %cst_54 : f32 to vector<2x128xf32>
    %98 = arith.mulf %97, %96 : vector<2x128xf32>
    %cst_55 = arith.constant 5.000000e-01 : f32
    %99 = vector.broadcast %cst_55 : f32 to vector<2x128xf32>
    %100 = arith.addf %99, %98 : vector<2x128xf32>
    %101 = vector.extract_strided_slice %100 {offsets = [0, 0], sizes = [2, 32], strides = [1, 1]} : vector<2x128xf32> to vector<2x32xf32>
    %102 = vector.extract_strided_slice %100 {offsets = [0, 32], sizes = [2, 32], strides = [1, 1]} : vector<2x128xf32> to vector<2x32xf32>
    %103 = vector.extract_strided_slice %96 {offsets = [0, 64], sizes = [2, 32], strides = [1, 1]} : vector<2x128xf32> to vector<2x32xf32>
    %104 = vector.extract_strided_slice %100 {offsets = [0, 96], sizes = [2, 32], strides = [1, 1]} : vector<2x128xf32> to vector<2x32xf32>
    %105 = arith.mulf %102, %90 : vector<2x32xf32>
    %106 = arith.mulf %101, %103 : vector<2x32xf32>
    %107 = arith.addf %105, %106 : vector<2x32xf32>
    %108 = math.tanh %107 : vector<2x32xf32>
    %109 = arith.mulf %104, %108 : vector<2x32xf32>
    %cst_56 = arith.constant dense<0.000000e+00> : vector<2x128xf32>
    %110 = tpu.matmul %109, %62, %cst_56 {dimension_numbers = #tpu.dot_dimension_numbers<[1], [0], [0], [1], [0, 0, 1, 1], [], []>} : vector<2x32xf32>, vector<32x128xf32>, vector<2x128xf32> -> vector<2x128xf32>
    %111 = arith.addf %56, %110 : vector<2x128xf32>
    %112 = arith.mulf %111, %73 : vector<2x128xf32>
    %113 = math.tanh %112 : vector<2x128xf32>
    %cst_57 = arith.constant 5.000000e-01 : f32
    %114 = vector.broadcast %cst_57 : f32 to vector<2x128xf32>
    %115 = arith.mulf %114, %113 : vector<2x128xf32>
    %cst_58 = arith.constant 5.000000e-01 : f32
    %116 = vector.broadcast %cst_58 : f32 to vector<2x128xf32>
    %117 = arith.addf %116, %115 : vector<2x128xf32>
    %118 = vector.extract_strided_slice %117 {offsets = [0, 0], sizes = [2, 32], strides = [1, 1]} : vector<2x128xf32> to vector<2x32xf32>
    %119 = vector.extract_strided_slice %117 {offsets = [0, 32], sizes = [2, 32], strides = [1, 1]} : vector<2x128xf32> to vector<2x32xf32>
    %120 = vector.extract_strided_slice %113 {offsets = [0, 64], sizes = [2, 32], strides = [1, 1]} : vector<2x128xf32> to vector<2x32xf32>
    %121 = vector.extract_strided_slice %117 {offsets = [0, 96], sizes = [2, 32], strides = [1, 1]} : vector<2x128xf32> to vector<2x32xf32>
    %122 = arith.mulf %119, %107 : vector<2x32xf32>
    %123 = arith.mulf %118, %120 : vector<2x32xf32>
    %124 = arith.addf %122, %123 : vector<2x32xf32>
    %125 = math.tanh %124 : vector<2x32xf32>
    %126 = arith.mulf %121, %125 : vector<2x32xf32>
    %cst_59 = arith.constant dense<0.000000e+00> : vector<2x128xf32>
    %127 = tpu.matmul %126, %62, %cst_59 {dimension_numbers = #tpu.dot_dimension_numbers<[1], [0], [0], [1], [0, 0, 1, 1], [], []>} : vector<2x32xf32>, vector<32x128xf32>, vector<2x128xf32> -> vector<2x128xf32>
    %128 = arith.addf %57, %127 : vector<2x128xf32>
    %129 = arith.mulf %128, %73 : vector<2x128xf32>
    %130 = math.tanh %129 : vector<2x128xf32>
    %cst_60 = arith.constant 5.000000e-01 : f32
    %131 = vector.broadcast %cst_60 : f32 to vector<2x128xf32>
    %132 = arith.mulf %131, %130 : vector<2x128xf32>
    %cst_61 = arith.constant 5.000000e-01 : f32
    %133 = vector.broadcast %cst_61 : f32 to vector<2x128xf32>
    %134 = arith.addf %133, %132 : vector<2x128xf32>
    %135 = vector.extract_strided_slice %134 {offsets = [0, 0], sizes = [2, 32], strides = [1, 1]} : vector<2x128xf32> to vector<2x32xf32>
    %136 = vector.extract_strided_slice %134 {offsets = [0, 32], sizes = [2, 32], strides = [1, 1]} : vector<2x128xf32> to vector<2x32xf32>
    %137 = vector.extract_strided_slice %130 {offsets = [0, 64], sizes = [2, 32], strides = [1, 1]} : vector<2x128xf32> to vector<2x32xf32>
    %138 = vector.extract_strided_slice %134 {offsets = [0, 96], sizes = [2, 32], strides = [1, 1]} : vector<2x128xf32> to vector<2x32xf32>
    %139 = arith.mulf %136, %124 : vector<2x32xf32>
    %140 = arith.mulf %135, %137 : vector<2x32xf32>
    %141 = arith.addf %139, %140 : vector<2x32xf32>
    %142 = math.tanh %141 : vector<2x32xf32>
    %143 = arith.mulf %138, %142 : vector<2x32xf32>
    %cst_62 = arith.constant dense<0.000000e+00> : vector<2x128xf32>
    %144 = tpu.matmul %143, %62, %cst_62 {dimension_numbers = #tpu.dot_dimension_numbers<[1], [0], [0], [1], [0, 0, 1, 1], [], []>} : vector<2x32xf32>, vector<32x128xf32>, vector<2x128xf32> -> vector<2x128xf32>
    %145 = arith.addf %58, %144 : vector<2x128xf32>
    %146 = arith.mulf %145, %73 : vector<2x128xf32>
    %147 = math.tanh %146 : vector<2x128xf32>
    %cst_63 = arith.constant 5.000000e-01 : f32
    %148 = vector.broadcast %cst_63 : f32 to vector<2x128xf32>
    %149 = arith.mulf %148, %147 : vector<2x128xf32>
    %cst_64 = arith.constant 5.000000e-01 : f32
    %150 = vector.broadcast %cst_64 : f32 to vector<2x128xf32>
    %151 = arith.addf %150, %149 : vector<2x128xf32>
    %152 = vector.extract_strided_slice %151 {offsets = [0, 0], sizes = [2, 32], strides = [1, 1]} : vector<2x128xf32> to vector<2x32xf32>
    %153 = vector.extract_strided_slice %151 {offsets = [0, 32], sizes = [2, 32], strides = [1, 1]} : vector<2x128xf32> to vector<2x32xf32>
    %154 = vector.extract_strided_slice %147 {offsets = [0, 64], sizes = [2, 32], strides = [1, 1]} : vector<2x128xf32> to vector<2x32xf32>
    %155 = vector.extract_strided_slice %151 {offsets = [0, 96], sizes = [2, 32], strides = [1, 1]} : vector<2x128xf32> to vector<2x32xf32>
    %156 = arith.mulf %153, %141 : vector<2x32xf32>
    %157 = arith.mulf %152, %154 : vector<2x32xf32>
    %158 = arith.addf %156, %157 : vector<2x32xf32>
    %159 = math.tanh %158 : vector<2x32xf32>
    %160 = arith.mulf %155, %159 : vector<2x32xf32>
    %cst_65 = arith.constant dense<0.000000e+00> : vector<2x128xf32>
    %161 = tpu.matmul %160, %62, %cst_65 {dimension_numbers = #tpu.dot_dimension_numbers<[1], [0], [0], [1], [0, 0, 1, 1], [], []>} : vector<2x32xf32>, vector<32x128xf32>, vector<2x128xf32> -> vector<2x128xf32>
    %162 = arith.addf %59, %161 : vector<2x128xf32>
    %163 = arith.mulf %162, %73 : vector<2x128xf32>
    %164 = math.tanh %163 : vector<2x128xf32>
    %cst_66 = arith.constant 5.000000e-01 : f32
    %165 = vector.broadcast %cst_66 : f32 to vector<2x128xf32>
    %166 = arith.mulf %165, %164 : vector<2x128xf32>
    %cst_67 = arith.constant 5.000000e-01 : f32
    %167 = vector.broadcast %cst_67 : f32 to vector<2x128xf32>
    %168 = arith.addf %167, %166 : vector<2x128xf32>
    %169 = vector.extract_strided_slice %168 {offsets = [0, 0], sizes = [2, 32], strides = [1, 1]} : vector<2x128xf32> to vector<2x32xf32>
    %170 = vector.extract_strided_slice %168 {offsets = [0, 32], sizes = [2, 32], strides = [1, 1]} : vector<2x128xf32> to vector<2x32xf32>
    %171 = vector.extract_strided_slice %164 {offsets = [0, 64], sizes = [2, 32], strides = [1, 1]} : vector<2x128xf32> to vector<2x32xf32>
    %172 = vector.extract_strided_slice %168 {offsets = [0, 96], sizes = [2, 32], strides = [1, 1]} : vector<2x128xf32> to vector<2x32xf32>
    %173 = arith.mulf %170, %158 : vector<2x32xf32>
    %174 = arith.mulf %169, %171 : vector<2x32xf32>
    %175 = arith.addf %173, %174 : vector<2x32xf32>
    %176 = math.tanh %175 : vector<2x32xf32>
    %177 = arith.mulf %172, %176 : vector<2x32xf32>
    %cst_68 = arith.constant dense<0.000000e+00> : vector<2x128xf32>
    %178 = tpu.matmul %177, %62, %cst_68 {dimension_numbers = #tpu.dot_dimension_numbers<[1], [0], [0], [1], [0, 0, 1, 1], [], []>} : vector<2x32xf32>, vector<32x128xf32>, vector<2x128xf32> -> vector<2x128xf32>
    %179 = arith.addf %60, %178 : vector<2x128xf32>
    %180 = arith.mulf %179, %73 : vector<2x128xf32>
    %181 = math.tanh %180 : vector<2x128xf32>
    %cst_69 = arith.constant 5.000000e-01 : f32
    %182 = vector.broadcast %cst_69 : f32 to vector<2x128xf32>
    %183 = arith.mulf %182, %181 : vector<2x128xf32>
    %cst_70 = arith.constant 5.000000e-01 : f32
    %184 = vector.broadcast %cst_70 : f32 to vector<2x128xf32>
    %185 = arith.addf %184, %183 : vector<2x128xf32>
    %186 = vector.extract_strided_slice %185 {offsets = [0, 0], sizes = [2, 32], strides = [1, 1]} : vector<2x128xf32> to vector<2x32xf32>
    %187 = vector.extract_strided_slice %185 {offsets = [0, 32], sizes = [2, 32], strides = [1, 1]} : vector<2x128xf32> to vector<2x32xf32>
    %188 = vector.extract_strided_slice %181 {offsets = [0, 64], sizes = [2, 32], strides = [1, 1]} : vector<2x128xf32> to vector<2x32xf32>
    %189 = vector.extract_strided_slice %185 {offsets = [0, 96], sizes = [2, 32], strides = [1, 1]} : vector<2x128xf32> to vector<2x32xf32>
    %190 = arith.mulf %187, %175 : vector<2x32xf32>
    %191 = arith.mulf %186, %188 : vector<2x32xf32>
    %192 = arith.addf %190, %191 : vector<2x32xf32>
    %193 = math.tanh %192 : vector<2x32xf32>
    %194 = arith.mulf %189, %193 : vector<2x32xf32>
    %cst_71 = arith.constant dense<0.000000e+00> : vector<2x128xf32>
    %195 = tpu.matmul %194, %62, %cst_71 {dimension_numbers = #tpu.dot_dimension_numbers<[1], [0], [0], [1], [0, 0, 1, 1], [], []>} : vector<2x32xf32>, vector<32x128xf32>, vector<2x128xf32> -> vector<2x128xf32>
    %196 = arith.addf %61, %195 : vector<2x128xf32>
    %197 = arith.mulf %196, %73 : vector<2x128xf32>
    %198 = math.tanh %197 : vector<2x128xf32>
    %cst_72 = arith.constant 5.000000e-01 : f32
    %199 = vector.broadcast %cst_72 : f32 to vector<2x128xf32>
    %200 = arith.mulf %199, %198 : vector<2x128xf32>
    %cst_73 = arith.constant 5.000000e-01 : f32
    %201 = vector.broadcast %cst_73 : f32 to vector<2x128xf32>
    %202 = arith.addf %201, %200 : vector<2x128xf32>
    %203 = vector.extract_strided_slice %202 {offsets = [0, 0], sizes = [2, 32], strides = [1, 1]} : vector<2x128xf32> to vector<2x32xf32>
    %204 = vector.extract_strided_slice %202 {offsets = [0, 32], sizes = [2, 32], strides = [1, 1]} : vector<2x128xf32> to vector<2x32xf32>
    %205 = vector.extract_strided_slice %198 {offsets = [0, 64], sizes = [2, 32], strides = [1, 1]} : vector<2x128xf32> to vector<2x32xf32>
    %206 = vector.extract_strided_slice %202 {offsets = [0, 96], sizes = [2, 32], strides = [1, 1]} : vector<2x128xf32> to vector<2x32xf32>
    %207 = arith.mulf %204, %192 : vector<2x32xf32>
    %208 = arith.mulf %203, %205 : vector<2x32xf32>
    %209 = arith.addf %207, %208 : vector<2x32xf32>
    %210 = math.tanh %209 : vector<2x32xf32>
    %211 = arith.mulf %206, %210 : vector<2x32xf32>
    %212 = vector.extract_strided_slice %92 {offsets = [0, 0], sizes = [1, 32], strides = [1, 1]} : vector<2x32xf32> to vector<1x32xf32>
    %213 = vector.extract_strided_slice %109 {offsets = [0, 0], sizes = [1, 32], strides = [1, 1]} : vector<2x32xf32> to vector<1x32xf32>
    %214 = vector.extract_strided_slice %126 {offsets = [0, 0], sizes = [1, 32], strides = [1, 1]} : vector<2x32xf32> to vector<1x32xf32>
    %215 = vector.extract_strided_slice %143 {offsets = [0, 0], sizes = [1, 32], strides = [1, 1]} : vector<2x32xf32> to vector<1x32xf32>
    %216 = vector.extract_strided_slice %160 {offsets = [0, 0], sizes = [1, 32], strides = [1, 1]} : vector<2x32xf32> to vector<1x32xf32>
    %217 = vector.extract_strided_slice %177 {offsets = [0, 0], sizes = [1, 32], strides = [1, 1]} : vector<2x32xf32> to vector<1x32xf32>
    %218 = vector.extract_strided_slice %194 {offsets = [0, 0], sizes = [1, 32], strides = [1, 1]} : vector<2x32xf32> to vector<1x32xf32>
    %219 = vector.extract_strided_slice %211 {offsets = [0, 0], sizes = [1, 32], strides = [1, 1]} : vector<2x32xf32> to vector<1x32xf32>
    %220 = tpu.concatenate %212, %213, %214, %215, %216, %217, %218, %219 in 0 : vector<1x32xf32>, vector<1x32xf32>, vector<1x32xf32>, vector<1x32xf32>, vector<1x32xf32>, vector<1x32xf32>, vector<1x32xf32>, vector<1x32xf32> -> vector<8x32xf32>
    %221 = vector.extract_strided_slice %92 {offsets = [1, 0], sizes = [1, 32], strides = [1, 1]} : vector<2x32xf32> to vector<1x32xf32>
    %222 = vector.extract_strided_slice %109 {offsets = [1, 0], sizes = [1, 32], strides = [1, 1]} : vector<2x32xf32> to vector<1x32xf32>
    %223 = vector.extract_strided_slice %126 {offsets = [1, 0], sizes = [1, 32], strides = [1, 1]} : vector<2x32xf32> to vector<1x32xf32>
    %224 = vector.extract_strided_slice %143 {offsets = [1, 0], sizes = [1, 32], strides = [1, 1]} : vector<2x32xf32> to vector<1x32xf32>
    %225 = vector.extract_strided_slice %160 {offsets = [1, 0], sizes = [1, 32], strides = [1, 1]} : vector<2x32xf32> to vector<1x32xf32>
    %226 = vector.extract_strided_slice %177 {offsets = [1, 0], sizes = [1, 32], strides = [1, 1]} : vector<2x32xf32> to vector<1x32xf32>
    %227 = vector.extract_strided_slice %194 {offsets = [1, 0], sizes = [1, 32], strides = [1, 1]} : vector<2x32xf32> to vector<1x32xf32>
    %228 = vector.extract_strided_slice %211 {offsets = [1, 0], sizes = [1, 32], strides = [1, 1]} : vector<2x32xf32> to vector<1x32xf32>
    %229 = tpu.concatenate %221, %222, %223, %224, %225, %226, %227, %228 in 0 : vector<1x32xf32>, vector<1x32xf32>, vector<1x32xf32>, vector<1x32xf32>, vector<1x32xf32>, vector<1x32xf32>, vector<1x32xf32>, vector<1x32xf32> -> vector<8x32xf32>
    %230 = tpu.concatenate %220, %229 in 0 : vector<8x32xf32>, vector<8x32xf32> -> vector<16x32xf32>
    %c0_74 = arith.constant 0 : index
    %c0_75 = arith.constant 0 : index
    %231 = vector.load %arg5[%c0_74, %c0_75] : memref<32x128xf32, #tpu.memory_space<vmem>>, vector<32x128xf32>
    %cst_76 = arith.constant dense<0.000000e+00> : vector<16x128xf32>
    %232 = tpu.matmul %230, %231, %cst_76 {dimension_numbers = #tpu.dot_dimension_numbers<[1], [0], [0], [1], [0, 0, 1, 1], [], []>} : vector<16x32xf32>, vector<32x128xf32>, vector<16x128xf32> -> vector<16x128xf32>
    %c0_77 = arith.constant 0 : index
    %c0_78 = arith.constant 0 : index
    %233 = vector.load %arg6[%c0_77, %c0_78] : memref<1x128xf32, #tpu.memory_space<vmem>>, vector<1x128xf32>
    %234 = vector.broadcast %233 : vector<1x128xf32> to vector<16x128xf32>
    %235 = arith.addf %232, %234 : vector<16x128xf32>
    %c0_79 = arith.constant 0 : index
    %c0_80 = arith.constant 0 : index
    %236 = vector.load %arg7[%c0_79, %c0_80] : memref<16x128xf32, #tpu.memory_space<vmem>>, vector<16x128xf32>
    tpu.vector_store %arg7[%c0_79, %c0_80], %235 {strides = array<i32>} : memref<16x128xf32, #tpu.memory_space<vmem>>, vector<16x128xf32>,
    return
  }
}

</mosaic_0001>

<llo_original>
// kernel: tpu_custom_call.1
$region0: #{tpu_custom_call.1}
  #allocation0 [shape = 'u32[]', space=smem, size = 0x4, offset = 0x4, fixed_abs, tag = 'smem constant byte address 0x4 - core index']
  #allocation1 [shape = 'u32[72,128]{1,0:T(1,128)}', space=vmem, size = 0x9000, scoped, tag = 'internal scratch']
  %s0 = inlined_call_operand.vmem [shape: s32[2,8], index: 0, kind: input, shape index: {}]
  %s1 = inlined_call_operand.vmem [shape: f32[32,16], index: 1, kind: input, shape index: {}]
  %s2 = inlined_call_operand.vmem [shape: f32[16,128], index: 2, kind: input, shape index: {}]
  %s3 = inlined_call_operand.vmem [shape: f32[32,128], index: 3, kind: input, shape index: {}]
  %s4 = inlined_call_operand.vmem [shape: f32[1,128], index: 4, kind: input, shape index: {}]
  %s5 = inlined_call_operand.hbm [shape: f32[32,128], index: 5, kind: input, shape index: {}]
  %s6 = inlined_call_operand.vmem [shape: f32[1,128], index: 6, kind: input, shape index: {}]
  %s7 = inlined_call_operand.hbm [shape: f32[16,128], index: 7, kind: output, shape index: {}]
  %s8 = sld [smem:[#allocation0]]
  $region46: #{tpu_custom_call.1} parent=0
    _
  %s10 = ssub.s32 1, %s8
  %s11 = scalar_select 0, %s10, %s8
  $region1: #{tpu_custom_call.1} parent=0
    #allocation2 [shape = 'u8[1024]{0}', space=smem, size = 0x400, scoped, tag = 'input window, operand 0, single buffered']
    #allocation3 [shape = 's32[1]{0}', space=sflag, size = 0x4, scoped, tag = 'scoped memory for tpu_custom_call.1']
    #allocation4 [shape = 's32[1]{0}', space=sflag, size = 0x4, scoped, tag = 'scoped memory for tpu_custom_call.1']
    #allocation5 [shape = 's32[1]{0}', space=sflag, size = 0x4, scoped, tag = 'scoped memory for tpu_custom_call.1']
    #allocation6 [shape = 'u8[16384]{0}', space=vmem, size = 0x4000, scoped, tag = 'input window, operand 5, single buffered']
    #allocation7 [shape = 'u8[8192]{0}', space=vmem, size = 0x2000, scoped, tag = 'output window, operand 0, single buffered']
    %12 = vsyncpa [#allocation5], 0
    %13 = vsyncpa [#allocation3], 0
    %14 = vsyncpa [#allocation4], 0
    // Predicated region
    $region2: #{tpu_custom_call.1} parent=1 // pred_check
      _
    $region3: #{tpu_custom_call.1} parent=1 // pred_check_branch
      %16 = sbr.rel (0) target = $region5
    $region4: #{tpu_custom_call.1} parent=1 // pred_region
      %18 = vsyncadd [#allocation5], 0
      %s20 = sshll.u32 %s0, 4
      %s21 = int_to_ptr.vmem [resolvable:$true] %s20
      %23 = dma.vmem_to_smem %s21, 32, [#allocation2], [#allocation5]
    $region5: #{tpu_custom_call.1} parent=1 // pred_fallthru
      _
    // Predicated region
    $region6: #{tpu_custom_call.1} parent=1 // pred_check
      _
    $region7: #{tpu_custom_call.1} parent=1 // pred_check_branch
      %25 = sbr.rel (0) target = $region9
    $region8: #{tpu_custom_call.1} parent=1 // pred_region
      _
    $region9: #{tpu_custom_call.1} parent=1 // pred_fallthru
      _
    // Predicated region
    $region10: #{tpu_custom_call.1} parent=1 // pred_check
      _
    $region11: #{tpu_custom_call.1} parent=1 // pred_check_branch
      %27 = sbr.rel (0) target = $region13
    $region12: #{tpu_custom_call.1} parent=1 // pred_region
      _
    $region13: #{tpu_custom_call.1} parent=1 // pred_fallthru
      _
    // Predicated region
    $region14: #{tpu_custom_call.1} parent=1 // pred_check
      _
    $region15: #{tpu_custom_call.1} parent=1 // pred_check_branch
      %29 = sbr.rel (0) target = $region17
    $region16: #{tpu_custom_call.1} parent=1 // pred_region
      _
    $region17: #{tpu_custom_call.1} parent=1 // pred_fallthru
      _
    // Predicated region
    $region18: #{tpu_custom_call.1} parent=1 // pred_check
      _
    $region19: #{tpu_custom_call.1} parent=1 // pred_check_branch
      %31 = sbr.rel (0) target = $region21
    $region20: #{tpu_custom_call.1} parent=1 // pred_region
      _
    $region21: #{tpu_custom_call.1} parent=1 // pred_fallthru
      _
    // Predicated region
    $region22: #{tpu_custom_call.1} parent=1 // pred_check
      _
    $region23: #{tpu_custom_call.1} parent=1 // pred_check_branch
      %33 = sbr.rel (0) target = $region25
    $region24: #{tpu_custom_call.1} parent=1 // pred_region
      %35 = vsyncadd [#allocation3], 0
      %s36 = sshll.u32 %s5, 4
      %s37 = int_to_ptr.hbm [resolvable:$true] %s36
      %s38 = sshll.u32 [#allocation6], 4
      %s39 = int_to_ptr.vmem [resolvable:$true] %s38
      %44 = dma.hbm_to_vmem [thread:$0]  %s37, 512, %s39, [#allocation3], 128, 128, 8
    $region25: #{tpu_custom_call.1} parent=1 // pred_fallthru
      _
    // Predicated region
    $region26: #{tpu_custom_call.1} parent=1 // pred_check
      _
    $region27: #{tpu_custom_call.1} parent=1 // pred_check_branch
      %46 = sbr.rel (0) target = $region29
    $region28: #{tpu_custom_call.1} parent=1 // pred_region
      _
    $region29: #{tpu_custom_call.1} parent=1 // pred_fallthru
      _
    // Predicated region
    $region30: #{tpu_custom_call.1} parent=1 // pred_check
      _
    $region31: #{tpu_custom_call.1} parent=1 // pred_check_branch
      %48 = sbr.rel (0) target = $region33
    $region32: #{tpu_custom_call.1} parent=1 // pred_region
      %50 = dma.done [#allocation5], 32
    $region33: #{tpu_custom_call.1} parent=1 // pred_fallthru
      _
    // Predicated region
    $region34: #{tpu_custom_call.1} parent=1 // pred_check
      _
    $region35: #{tpu_custom_call.1} parent=1 // pred_check_branch
      %52 = sbr.rel (0) target = $region37
    $region36: #{tpu_custom_call.1} parent=1 // pred_region
      %54 = dma.done [#allocation3], 512
    $region37: #{tpu_custom_call.1} parent=1 // pred_fallthru
      _
    %55 = sfence
    %s56 = sld [smem:[#allocation2]]
    %s57 = scalar_lea.vmem %s1, %s56
    %v58 = vld [vmem:[%s57] sm:$0x1]
    %s59 = sld [smem:[#allocation2 + $0x80]]
    %s60 = scalar_lea.vmem %s1, %s59
    %v61 = vld [vmem:[%s60] sm:$0x1]
    %s62 = sld [smem:[#allocation2 + $0x1]]
    %s63 = scalar_lea.vmem %s1, %s62
    %v64 = vld [vmem:[%s63] sm:$0x1]
    %s65 = sld [smem:[#allocation2 + $0x81]]
    %s66 = scalar_lea.vmem %s1, %s65
    %v67 = vld [vmem:[%s66] sm:$0x1]
    %s68 = sld [smem:[#allocation2 + $0x2]]
    %s69 = scalar_lea.vmem %s1, %s68
    %v70 = vld [vmem:[%s69] sm:$0x1]
    %s71 = sld [smem:[#allocation2 + $0x82]]
    %s72 = scalar_lea.vmem %s1, %s71
    %v73 = vld [vmem:[%s72] sm:$0x1]
    %s74 = sld [smem:[#allocation2 + $0x3]]
    %s75 = scalar_lea.vmem %s1, %s74
    %v76 = vld [vmem:[%s75] sm:$0x1]
    %s77 = sld [smem:[#allocation2 + $0x83]]
    %s78 = scalar_lea.vmem %s1, %s77
    %v79 = vld [vmem:[%s78] sm:$0x1]
    %s80 = sld [smem:[#allocation2 + $0x4]]
    %s81 = scalar_lea.vmem %s1, %s80
    %v82 = vld [vmem:[%s81] sm:$0x1]
    %s83 = sld [smem:[#allocation2 + $0x84]]
    %s84 = scalar_lea.vmem %s1, %s83
    %v85 = vld [vmem:[%s84] sm:$0x1]
    %s86 = sld [smem:[#allocation2 + $0x5]]
    %s87 = scalar_lea.vmem %s1, %s86
    %v88 = vld [vmem:[%s87] sm:$0x1]
    %s89 = sld [smem:[#allocation2 + $0x85]]
    %s90 = scalar_lea.vmem %s1, %s89
    %v91 = vld [vmem:[%s90] sm:$0x1]
    %s92 = sld [smem:[#allocation2 + $0x6]]
    %s93 = scalar_lea.vmem %s1, %s92
    %v94 = vld [vmem:[%s93] sm:$0x1]
    %s95 = sld [smem:[#allocation2 + $0x86]]
    %s96 = scalar_lea.vmem %s1, %s95
    %v97 = vld [vmem:[%s96] sm:$0x1]
    %s98 = sld [smem:[#allocation2 + $0x7]]
    %s99 = scalar_lea.vmem %s1, %s98
    %v100 = vld [vmem:[%s99] sm:$0x1]
    %s101 = sld [smem:[#allocation2 + $0x87]]
    %s102 = scalar_lea.vmem %s1, %s101
    %v103 = vld [vmem:[%s102] sm:$0x1]
    %v105 = vrot.slane %v61, 7
    %v108 = vrot.slane %v64, 6
    %v111 = vrot.slane %v67, 5
    %v114 = vrot.slane %v70, 4
    %v117 = vrot.slane %v73, 3
    %v120 = vrot.slane %v76, 2
    %v123 = vrot.slane %v79, 1
    %v126 = vrot.slane %v85, 7
    %v129 = vrot.slane %v88, 6
    %v132 = vrot.slane %v91, 5
    %v135 = vrot.slane %v94, 4
    %v138 = vrot.slane %v97, 3
    %v141 = vrot.slane %v100, 2
    %v144 = vrot.slane %v103, 1
    %vm146 = vcmask 1040384
    %v147 = vsel %vm146, %v58, %v105
    %vm148 = vcmask 1041408
    %v149 = vsel %vm148, %v147, %v108
    %vm150 = vcmask 1042432
    %v151 = vsel %vm150, %v149, %v111
    %vm152 = vcmask 1043456
    %v153 = vsel %vm152, %v151, %v114
    %vm154 = vcmask 1044480
    %v155 = vsel %vm154, %v153, %v117
    %vm156 = vcmask 1045504
    %v157 = vsel %vm156, %v155, %v120
    %vm158 = vcmask 1046528
    %v159 = vsel %vm158, %v157, %v123
    %v160 = vsel %vm146, %v82, %v126
    %v161 = vsel %vm148, %v160, %v129
    %v162 = vsel %vm150, %v161, %v132
    %v163 = vsel %vm152, %v162, %v135
    %v164 = vsel %vm154, %v163, %v138
    %v165 = vsel %vm156, %v164, %v141
    %v166 = vsel %vm158, %v165, %v144
    %v167 = vld [vmem:[%s2] sm:$0xff]
    %v168 = vld [vmem:[%s2 + $0x8] sm:$0xff]
    %v169 = vld [vmem:[%s4] sm:$0x1]
    %v171 = vperm.slane %v169, 0
    %vm173 = vcmask 130048
    %v175 = vsel %vm173, %v159, 0
    %v178 = vsel %vm173, %v166, 0
    %180 = vmatpush.msra.mxu0 0.0
    %181 = vmatpush.msra.mxu0 0.0
    %182 = vmatpush.msra.mxu0 0.0
    %183 = vmatpush.msra.mxu0 0.0
    %184 = vmatpush.msra.mxu0 0.0
    %185 = vmatpush.msra.mxu0 0.0
    %186 = vmatpush.msra.mxu0 0.0
    %187 = vmatpush.msra.mxu0 0.0
    %188 = vmatpush.msra.mxu0 0.0
    %189 = vmatpush.msra.mxu0 0.0
    %190 = vmatpush.msra.mxu0 0.0
    %191 = vmatpush.msra.mxu0 0.0
    %192 = vmatpush.msra.mxu0 0.0
    %193 = vmatpush.msra.mxu0 0.0
    %194 = vmatpush.msra.mxu0 %v168
    %195 = vmatpush.msra.mxu0 %v167
    %196 = vmatmul.f32.gmra.mxu0 %v175
    %v197 = vpop.f32.mrf.mxu0
    %v198 = vadd.f32 %v171, %v197
    %199 = vmatmul.f32.gmra.mxu0 %v178
    %v200 = vpop.f32.mrf.mxu0
    %v201 = vadd.f32 %v171, %v200
    %202 = vdwg.mxu0
    %v203 = vld [vmem:[%s3] sm:$0xff]
    %v204 = vld [vmem:[%s3 + $0x8] sm:$0xff]
    %v205 = vld [vmem:[%s3 + $0x10] sm:$0xff]
    %v206 = vld [vmem:[%s3 + $0x18] sm:$0xff]
    %v207 = vlaneseq
    %v208 = vand.u32 %v207, 127
    %vm209 = vcmp.ge.s32.totalorder %v208, 64
    %vm210 = vcmp.lt.s32.totalorder %v208, 96
    %vm211 = vmand %vm209, %vm210
    %v212 = vsel %vm211, 1.0, 0.5
    %vm213 = vcmask 261120
    %v215 = vsel %vm213, 0.0, 0
    %217 = vmatpush.msra.mxu0 0.0
    %218 = vmatpush.msra.mxu0 0.0
    %219 = vmatpush.msra.mxu0 0.0
    %220 = vmatpush.msra.mxu0 0.0
    %221 = vmatpush.msra.mxu0 0.0
    %222 = vmatpush.msra.mxu0 0.0
    %223 = vmatpush.msra.mxu0 0.0
    %224 = vmatpush.msra.mxu0 0.0
    %225 = vmatpush.msra.mxu0 0.0
    %226 = vmatpush.msra.mxu0 0.0
    %227 = vmatpush.msra.mxu0 0.0
    %228 = vmatpush.msra.mxu0 0.0
    %229 = vmatpush.msra.mxu0 %v206
    %230 = vmatpush.msra.mxu0 %v205
    %231 = vmatpush.msra.mxu0 %v204
    %232 = vmatpush.msra.mxu0 %v203
    %233 = vmatmul.f32.gmra.mxu0 %v215
    %v234 = vpop.f32.mrf.mxu0
    %v235 = vadd.f32 0.0, %v234
    %236 = vdwg.mxu0
    %v237 = vadd.f32 %v198, %v235
    %v238 = vmul.f32 %v237, %v212
    %v239 = vtanh.pop %v238
    %v240 = vmul.f32 %v239, 0.5
    %v241 = vadd.f32 %v240, 0.5
    %v242 = vmul.f32 %v241, 0.0
    %244 = vrot.lane.b32.xlu0 %v239, 64
    %v245 = vpop.permute.xlu0 %244
    %v247 = vmul.f32 %v241, %v245
    %249 = vrot.lane.b32.xlu0 %v247, 32
    %v250 = vpop.permute.xlu0 %249
    %v252 = vadd.f32 %v242, %v250
    %v253 = vtanh.pop %v252
    %255 = vrot.lane.b32.xlu0 %v253, 64
    %v256 = vpop.permute.xlu0 %255
    %v258 = vmul.f32 %v241, %v256
    %260 = vrot.lane.b32.xlu0 %v258, 32
    %v261 = vpop.permute.xlu0 %260
    %v262 = vsel %vm213, %v261, 0
    %264 = vmatpush.msra.mxu0 0.0
    %265 = vmatpush.msra.mxu0 0.0
    %266 = vmatpush.msra.mxu0 0.0
    %267 = vmatpush.msra.mxu0 0.0
    %268 = vmatpush.msra.mxu0 0.0
    %269 = vmatpush.msra.mxu0 0.0
    %270 = vmatpush.msra.mxu0 0.0
    %271 = vmatpush.msra.mxu0 0.0
    %272 = vmatpush.msra.mxu0 0.0
    %273 = vmatpush.msra.mxu0 0.0
    %274 = vmatpush.msra.mxu0 0.0
    %275 = vmatpush.msra.mxu0 0.0
    %276 = vmatpush.msra.mxu0 %v206
    %277 = vmatpush.msra.mxu0 %v205
    %278 = vmatpush.msra.mxu0 %v204
    %279 = vmatpush.msra.mxu0 %v203
    %280 = vmatmul.f32.gmra.mxu0 %v262
    %v281 = vpop.f32.mrf.mxu0
    %v282 = vadd.f32 0.0, %v281
    %283 = vdwg.mxu0
    %v285 = vrot.slane %v282, 6
    %v287 = vadd.f32 %v198, %v285
    %v288 = vmul.f32 %v287, %v212
    %v289 = vtanh.pop %v288
    %v290 = vmul.f32 %v289, 0.5
    %v291 = vadd.f32 %v290, 0.5
    %v293 = vrot.slane %v252, 6
    %v295 = vmul.f32 %v291, %v293
    %297 = vrot.lane.b32.xlu0 %v289, 64
    %v298 = vpop.permute.xlu0 %297
    %v300 = vmul.f32 %v291, %v298
    %302 = vrot.lane.b32.xlu0 %v300, 32
    %v303 = vpop.permute.xlu0 %302
    %v305 = vadd.f32 %v295, %v303
    %v306 = vtanh.pop %v305
    %308 = vrot.lane.b32.xlu0 %v306, 64
    %v309 = vpop.permute.xlu0 %308
    %v311 = vmul.f32 %v291, %v309
    %v313 = vrot.slane %v311, 2
    %314 = vrot.lane.b32.xlu0 %v313, 32
    %v315 = vpop.permute.xlu0 %314
    %v316 = vsel %vm213, %v315, 0
    %318 = vmatpush.msra.mxu0 0.0
    %319 = vmatpush.msra.mxu0 0.0
    %320 = vmatpush.msra.mxu0 0.0
    %321 = vmatpush.msra.mxu0 0.0
    %322 = vmatpush.msra.mxu0 0.0
    %323 = vmatpush.msra.mxu0 0.0
    %324 = vmatpush.msra.mxu0 0.0
    %325 = vmatpush.msra.mxu0 0.0
    %326 = vmatpush.msra.mxu0 0.0
    %327 = vmatpush.msra.mxu0 0.0
    %328 = vmatpush.msra.mxu0 0.0
    %329 = vmatpush.msra.mxu0 0.0
    %330 = vmatpush.msra.mxu0 %v206
    %331 = vmatpush.msra.mxu0 %v205
    %332 = vmatpush.msra.mxu0 %v204
    %333 = vmatpush.msra.mxu0 %v203
    %334 = vmatmul.f32.gmra.mxu0 %v316
    %v335 = vpop.f32.mrf.mxu0
    %v336 = vadd.f32 0.0, %v335
    %337 = vdwg.mxu0
    %v339 = vrot.slane %v336, 4
    %v341 = vadd.f32 %v198, %v339
    %v342 = vmul.f32 %v341, %v212
    %v343 = vtanh.pop %v342
    %v344 = vmul.f32 %v343, 0.5
    %v345 = vadd.f32 %v344, 0.5
    %v347 = vrot.slane %v305, 6
    %v349 = vmul.f32 %v345, %v347
    %351 = vrot.lane.b32.xlu0 %v343, 64
    %v352 = vpop.permute.xlu0 %351
    %v354 = vmul.f32 %v345, %v352
    %356 = vrot.lane.b32.xlu0 %v354, 32
    %v357 = vpop.permute.xlu0 %356
    %v359 = vadd.f32 %v349, %v357
    %v360 = vtanh.pop %v359
    %362 = vrot.lane.b32.xlu0 %v360, 64
    %v363 = vpop.permute.xlu0 %362
    %v365 = vmul.f32 %v345, %v363
    %v367 = vrot.slane %v365, 4
    %368 = vrot.lane.b32.xlu0 %v367, 32
    %v369 = vpop.permute.xlu0 %368
    %v370 = vsel %vm213, %v369, 0
    %372 = vmatpush.msra.mxu0 0.0
    %373 = vmatpush.msra.mxu0 0.0
    %374 = vmatpush.msra.mxu0 0.0
    %375 = vmatpush.msra.mxu0 0.0
    %376 = vmatpush.msra.mxu0 0.0
    %377 = vmatpush.msra.mxu0 0.0
    %378 = vmatpush.msra.mxu0 0.0
    %379 = vmatpush.msra.mxu0 0.0
    %380 = vmatpush.msra.mxu0 0.0
    %381 = vmatpush.msra.mxu0 0.0
    %382 = vmatpush.msra.mxu0 0.0
    %383 = vmatpush.msra.mxu0 0.0
    %384 = vmatpush.msra.mxu0 %v206
    %385 = vmatpush.msra.mxu0 %v205
    %386 = vmatpush.msra.mxu0 %v204
    %387 = vmatpush.msra.mxu0 %v203
    %388 = vmatmul.f32.gmra.mxu0 %v370
    %v389 = vpop.f32.mrf.mxu0
    %v390 = vadd.f32 0.0, %v389
    %391 = vdwg.mxu0
    %v393 = vrot.slane %v390, 2
    %v395 = vadd.f32 %v198, %v393
    %v396 = vmul.f32 %v395, %v212
    %v397 = vtanh.pop %v396
    %v398 = vmul.f32 %v397, 0.5
    %v399 = vadd.f32 %v398, 0.5
    %v401 = vrot.slane %v359, 6
    %v403 = vmul.f32 %v399, %v401
    %405 = vrot.lane.b32.xlu0 %v397, 64
    %v406 = vpop.permute.xlu0 %405
    %v408 = vmul.f32 %v399, %v406
    %410 = vrot.lane.b32.xlu0 %v408, 32
    %v411 = vpop.permute.xlu0 %410
    %v413 = vadd.f32 %v403, %v411
    %v414 = vtanh.pop %v413
    %416 = vrot.lane.b32.xlu0 %v414, 64
    %v417 = vpop.permute.xlu0 %416
    %v419 = vmul.f32 %v399, %v417
    %v421 = vrot.slane %v419, 6
    %422 = vrot.lane.b32.xlu0 %v421, 32
    %v423 = vpop.permute.xlu0 %422
    %v424 = vsel %vm213, %v423, 0
    %426 = vmatpush.msra.mxu0 0.0
    %427 = vmatpush.msra.mxu0 0.0
    %428 = vmatpush.msra.mxu0 0.0
    %429 = vmatpush.msra.mxu0 0.0
    %430 = vmatpush.msra.mxu0 0.0
    %431 = vmatpush.msra.mxu0 0.0
    %432 = vmatpush.msra.mxu0 0.0
    %433 = vmatpush.msra.mxu0 0.0
    %434 = vmatpush.msra.mxu0 0.0
    %435 = vmatpush.msra.mxu0 0.0
    %436 = vmatpush.msra.mxu0 0.0
    %437 = vmatpush.msra.mxu0 0.0
    %438 = vmatpush.msra.mxu0 %v206
    %439 = vmatpush.msra.mxu0 %v205
    %440 = vmatpush.msra.mxu0 %v204
    %441 = vmatpush.msra.mxu0 %v203
    %442 = vmatmul.f32.gmra.mxu0 %v424
    %v443 = vpop.f32.mrf.mxu0
    %v444 = vadd.f32 0.0, %v443
    %445 = vdwg.mxu0
    %v446 = vadd.f32 %v201, %v444
    %v447 = vmul.f32 %v446, %v212
    %v448 = vtanh.pop %v447
    %v449 = vmul.f32 %v448, 0.5
    %v450 = vadd.f32 %v449, 0.5
    %v452 = vrot.slane %v413, 6
    %v454 = vmul.f32 %v450, %v452
    %456 = vrot.lane.b32.xlu0 %v448, 64
    %v457 = vpop.permute.xlu0 %456
    %v459 = vmul.f32 %v450, %v457
    %461 = vrot.lane.b32.xlu0 %v459, 32
    %v462 = vpop.permute.xlu0 %461
    %v464 = vadd.f32 %v454, %v462
    %v465 = vtanh.pop %v464
    %467 = vrot.lane.b32.xlu0 %v465, 64
    %v468 = vpop.permute.xlu0 %467
    %v470 = vmul.f32 %v450, %v468
    %472 = vrot.lane.b32.xlu0 %v470, 32
    %v473 = vpop.permute.xlu0 %472
    %v474 = vsel %vm213, %v473, 0
    %476 = vmatpush.msra.mxu0 0.0
    %477 = vmatpush.msra.mxu0 0.0
    %478 = vmatpush.msra.mxu0 0.0
    %479 = vmatpush.msra.mxu0 0.0
    %480 = vmatpush.msra.mxu0 0.0
    %481 = vmatpush.msra.mxu0 0.0
    %482 = vmatpush.msra.mxu0 0.0
    %483 = vmatpush.msra.mxu0 0.0
    %484 = vmatpush.msra.mxu0 0.0
    %485 = vmatpush.msra.mxu0 0.0
    %486 = vmatpush.msra.mxu0 0.0
    %487 = vmatpush.msra.mxu0 0.0
    %488 = vmatpush.msra.mxu0 %v206
    %489 = vmatpush.msra.mxu0 %v205
    %490 = vmatpush.msra.mxu0 %v204
    %491 = vmatpush.msra.mxu0 %v203
    %492 = vmatmul.f32.gmra.mxu0 %v474
    %v493 = vpop.f32.mrf.mxu0
    %v494 = vadd.f32 0.0, %v493
    %495 = vdwg.mxu0
    %v497 = vrot.slane %v494, 6
    %v499 = vadd.f32 %v201, %v497
    %v500 = vmul.f32 %v499, %v212
    %v501 = vtanh.pop %v500
    %v502 = vmul.f32 %v501, 0.5
    %v503 = vadd.f32 %v502, 0.5
    %v505 = vrot.slane %v464, 6
    %v507 = vmul.f32 %v503, %v505
    %509 = vrot.lane.b32.xlu0 %v501, 64
    %v510 = vpop.permute.xlu0 %509
    %v512 = vmul.f32 %v503, %v510
    %514 = vrot.lane.b32.xlu0 %v512, 32
    %v515 = vpop.permute.xlu0 %514
    %v517 = vadd.f32 %v507, %v515
    %v518 = vtanh.pop %v517
    %520 = vrot.lane.b32.xlu0 %v518, 64
    %v521 = vpop.permute.xlu0 %520
    %v523 = vmul.f32 %v503, %v521
    %v525 = vrot.slane %v523, 2
    %526 = vrot.lane.b32.xlu0 %v525, 32
    %v527 = vpop.permute.xlu0 %526
    %v528 = vsel %vm213, %v527, 0
    %530 = vmatpush.msra.mxu0 0.0
    %531 = vmatpush.msra.mxu0 0.0
    %532 = vmatpush.msra.mxu0 0.0
    %533 = vmatpush.msra.mxu0 0.0
    %534 = vmatpush.msra.mxu0 0.0
    %535 = vmatpush.msra.mxu0 0.0
    %536 = vmatpush.msra.mxu0 0.0
    %537 = vmatpush.msra.mxu0 0.0
    %538 = vmatpush.msra.mxu0 0.0
    %539 = vmatpush.msra.mxu0 0.0
    %540 = vmatpush.msra.mxu0 0.0
    %541 = vmatpush.msra.mxu0 0.0
    %542 = vmatpush.msra.mxu0 %v206
    %543 = vmatpush.msra.mxu0 %v205
    %544 = vmatpush.msra.mxu0 %v204
    %545 = vmatpush.msra.mxu0 %v203
    %546 = vmatmul.f32.gmra.mxu0 %v528
    %v547 = vpop.f32.mrf.mxu0
    %v548 = vadd.f32 0.0, %v547
    %549 = vdwg.mxu0
    %v551 = vrot.slane %v548, 4
    %v553 = vadd.f32 %v201, %v551
    %v554 = vmul.f32 %v553, %v212
    %v555 = vtanh.pop %v554
    %v556 = vmul.f32 %v555, 0.5
    %v557 = vadd.f32 %v556, 0.5
    %v559 = vrot.slane %v517, 6
    %v561 = vmul.f32 %v557, %v559
    %563 = vrot.lane.b32.xlu0 %v555, 64
    %v564 = vpop.permute.xlu0 %563
    %v566 = vmul.f32 %v557, %v564
    %568 = vrot.lane.b32.xlu0 %v566, 32
    %v569 = vpop.permute.xlu0 %568
    %v571 = vadd.f32 %v561, %v569
    %v572 = vtanh.pop %v571
    %574 = vrot.lane.b32.xlu0 %v572, 64
    %v575 = vpop.permute.xlu0 %574
    %v577 = vmul.f32 %v557, %v575
    %v579 = vrot.slane %v577, 4
    %580 = vrot.lane.b32.xlu0 %v579, 32
    %v581 = vpop.permute.xlu0 %580
    %v582 = vsel %vm213, %v581, 0
    %584 = vmatpush.msra.mxu0 0.0
    %585 = vmatpush.msra.mxu0 0.0
    %586 = vmatpush.msra.mxu0 0.0
    %587 = vmatpush.msra.mxu0 0.0
    %588 = vmatpush.msra.mxu0 0.0
    %589 = vmatpush.msra.mxu0 0.0
    %590 = vmatpush.msra.mxu0 0.0
    %591 = vmatpush.msra.mxu0 0.0
    %592 = vmatpush.msra.mxu0 0.0
    %593 = vmatpush.msra.mxu0 0.0
    %594 = vmatpush.msra.mxu0 0.0
    %595 = vmatpush.msra.mxu0 0.0
    %596 = vmatpush.msra.mxu0 %v206
    %597 = vmatpush.msra.mxu0 %v205
    %598 = vmatpush.msra.mxu0 %v204
    %599 = vmatpush.msra.mxu0 %v203
    %600 = vmatmul.f32.gmra.mxu0 %v582
    %v601 = vpop.f32.mrf.mxu0
    %v602 = vadd.f32 0.0, %v601
    %603 = vdwg.mxu0
    %v605 = vrot.slane %v602, 2
    %v607 = vadd.f32 %v201, %v605
    %v608 = vmul.f32 %v607, %v212
    %v609 = vtanh.pop %v608
    %v610 = vmul.f32 %v609, 0.5
    %v611 = vadd.f32 %v610, 0.5
    %v613 = vrot.slane %v571, 6
    %v615 = vmul.f32 %v611, %v613
    %617 = vrot.lane.b32.xlu0 %v609, 64
    %v618 = vpop.permute.xlu0 %617
    %v620 = vmul.f32 %v611, %v618
    %622 = vrot.lane.b32.xlu0 %v620, 32
    %v623 = vpop.permute.xlu0 %622
    %v625 = vadd.f32 %v615, %v623
    %v626 = vtanh.pop %v625
    %628 = vrot.lane.b32.xlu0 %v626, 64
    %v629 = vpop.permute.xlu0 %628
    %v631 = vmul.f32 %v611, %v629
    %v632 = vrot.slane %v311, 1
    %v634 = vrot.slane %v365, 2
    %v636 = vrot.slane %v419, 3
    %v638 = vrot.slane %v470, 4
    %v640 = vrot.slane %v523, 5
    %v642 = vrot.slane %v577, 6
    %v645 = vrot.slane %v631, 7
    %v647 = vsel %vm146, %v258, %v632
    %v648 = vsel %vm148, %v647, %v634
    %v649 = vsel %vm150, %v648, %v636
    %v650 = vsel %vm152, %v649, %v638
    %v651 = vsel %vm154, %v650, %v640
    %v652 = vsel %vm156, %v651, %v642
    %v653 = vsel %vm158, %v652, %v645
    %v654 = vrot.slane %v258, 1
    %v657 = vrot.slane %v365, 3
    %v659 = vrot.slane %v419, 4
    %v661 = vrot.slane %v470, 5
    %v663 = vrot.slane %v523, 6
    %v665 = vrot.slane %v577, 7
    %v667 = vsel %vm146, %v654, %v313
    %v668 = vsel %vm148, %v667, %v657
    %v669 = vsel %vm150, %v668, %v659
    %v670 = vsel %vm152, %v669, %v661
    %v671 = vsel %vm154, %v670, %v663
    %v672 = vsel %vm156, %v671, %v665
    %v673 = vsel %vm158, %v672, %v631
    %v674 = vld [vmem:[#allocation6] sm:$0xff]
    %v675 = vld [vmem:[#allocation6 + $0x8] sm:$0xff]
    %v676 = vld [vmem:[#allocation6 + $0x10] sm:$0xff]
    %v677 = vld [vmem:[#allocation6 + $0x18] sm:$0xff]
    %v678 = vld [vmem:[%s6] sm:$0x1]
    %v680 = vperm.slane %v678, 0
    %684 = vrot.lane.b32.xlu0 %v653, 32
    %v685 = vpop.permute.xlu0 %684
    %686 = vrot.lane.b32.xlu0 %v673, 32
    %v687 = vpop.permute.xlu0 %686
    %v688 = vsel %vm213, %v685, 0
    %v690 = vsel %vm213, %v687, 0
    %692 = vmatpush.msra.mxu0 0.0
    %693 = vmatpush.msra.mxu0 0.0
    %694 = vmatpush.msra.mxu0 0.0
    %695 = vmatpush.msra.mxu0 0.0
    %696 = vmatpush.msra.mxu0 0.0
    %697 = vmatpush.msra.mxu0 0.0
    %698 = vmatpush.msra.mxu0 0.0
    %699 = vmatpush.msra.mxu0 0.0
    %700 = vmatpush.msra.mxu0 0.0
    %701 = vmatpush.msra.mxu0 0.0
    %702 = vmatpush.msra.mxu0 0.0
    %703 = vmatpush.msra.mxu0 0.0
    %704 = vmatpush.msra.mxu0 %v677
    %705 = vmatpush.msra.mxu0 %v676
    %706 = vmatpush.msra.mxu0 %v675
    %707 = vmatpush.msra.mxu0 %v674
    %708 = vmatmul.f32.gmra.mxu0 %v688
    %v709 = vpop.f32.mrf.mxu0
    %v710 = vadd.f32 %v680, %v709
    %711 = vmatmul.f32.gmra.mxu0 %v690
    %v712 = vpop.f32.mrf.mxu0
    %v713 = vadd.f32 %v680, %v712
    %714 = vdwg.mxu0
    %715 = vst [vmem:[#allocation7] sm:$0xff] %v710
    %716 = vst [vmem:[#allocation7 + $0x8] sm:$0xff] %v713
    // Predicated region
    $region38: #{tpu_custom_call.1} parent=1 // pred_check
      _
    $region39: #{tpu_custom_call.1} parent=1 // pred_check_branch
      %718 = sbr.rel (0) target = $region41
    $region40: #{tpu_custom_call.1} parent=1 // pred_region
      %720 = vsyncadd [#allocation4], 0
      %s721 = sshll.u32 [#allocation7], 4
      %s722 = int_to_ptr.vmem [resolvable:$true] %s721
      %s723 = sshll.u32 %s7, 4
      %s724 = int_to_ptr.hbm [resolvable:$true] %s723
      %729 = dma.vmem_to_hbm [thread:$0]  %s722, 256, %s724, [#allocation4], 128, 128, 8
    $region41: #{tpu_custom_call.1} parent=1 // pred_fallthru
      _
    // Predicated region
    $region42: #{tpu_custom_call.1} parent=1 // pred_check
      _
    $region43: #{tpu_custom_call.1} parent=1 // pred_check_branch
      %731 = sbr.rel (0) target = $region45
    $region44: #{tpu_custom_call.1} parent=1 // pred_region
      %733 = dma.done [#allocation4], 256
    $region45: #{tpu_custom_call.1} parent=1 // pred_fallthru
      _
    %734 = vsyncpa [#allocation3], 1
    %735 = vsyncpa [#allocation4], 1
    %736 = vsyncpa [#allocation5], 1

</llo_original>
